<compile_context>
chip_gen: v7x
topology: tpu7x:2x2x1
jax: 0.10.0
libtpu: 0.0.40
codegen_flags: <defaults>
</compile_context>

<pallas_src>
import jax
import jax.numpy as jnp
from jax.experimental import pallas as pl
from jax.experimental.pallas import tpu as pltpu


def _make_linear_kernel(g, f):
    """Kernel for y = x.w + b with g original rows packed per 128-lane group.

    x_ref: (TB, g*f) tile (stored dtype, upcast in-kernel)
    w_ref: (1, g*f)  f32 weight row tiled g times, VMEM-resident across grid
    b_ref: (1,)      f32 scalar bias in SMEM
    o_ref: (TB,)     if g == 1 (lane-dense 1-D output)
           (TB, g)   if g  > 1 (one output column per packed row)
    """

    def kernel(x_ref, w_ref, b_ref, o_ref):
        x = x_ref[...].astype(jnp.float32)
        w = w_ref[...].astype(jnp.float32)        # (1, g*f) broadcasts over rows
        prod = x * w                              # VPU
        b = b_ref[0]                              # scalar bias from SMEM
        if g == 1:
            # Plain row reduce (XLU); exact f32 accumulation.
            o_ref[...] = (jnp.sum(prod, axis=-1) + b).astype(o_ref.dtype)
        else:
            # Segmented reduce: lanes [c*f, (c+1)*f) hold packed row c.
            lane = jax.lax.broadcasted_iota(jnp.int32, prod.shape, 1)
            cols = []
            for c in range(g):
                m = (lane >= c * f) & (lane < (c + 1) * f)
                cols.append(
                    jnp.sum(jnp.where(m, prod, 0.0), axis=-1, keepdims=True) + b)
            o_ref[...] = jnp.concatenate(cols, axis=-1).astype(o_ref.dtype)

    return kernel


def _vmem_capacity_bytes():
    try:
        cap = getattr(pltpu.get_tpu_info(), "vmem_capacity_bytes", None)
        if cap:
            return int(cap)
    except Exception:
        pass
    return 64 * 1024 * 1024            # conservative default (v7x-sized)


def _num_tensorcores():
    try:
        info = pltpu.get_tpu_info()
        for name in ("num_cores", "core_count", "num_tensorcores",
                     "tensorcore_count"):
            n = getattr(info, name, None)
            if n is not None:
                return int(n)
    except Exception:
        pass
    return 1


def _choose_row_tile(n_rows, n_cols, x_itemsize, out_row_bytes, vmem_capacity):
    """Rows per x tile, sized against the lane-padded VMEM footprint."""
    cols_padded = ((n_cols + 127) // 128) * 128
    if vmem_capacity >= 96 * 1024 * 1024:
        # v5e / v6e: 128 MiB physical VMEM -> larger blocks, higher limit.
        target_bytes, vmem_limit = 16 * 1024 * 1024, 64 * 1024 * 1024
    else:
        # v7x: 64 MiB physical / 32 MiB default-scoped VMEM -> smaller blocks.
        target_bytes, vmem_limit = 8 * 1024 * 1024, 32 * 1024 * 1024
    per_row = cols_padded * x_itemsize + out_row_bytes
    tb = max(128, (target_bytes // per_row) // 128 * 128)
    if n_rows <= tb:
        tb = n_rows                     # single full-extent block
    # Make sure double-buffered blocks (+ resident weight + slack) fit.
    need = 2 * tb * per_row + cols_padded * 4 + (4 << 20)
    vmem_limit = max(vmem_limit, min(int(vmem_capacity * 3 // 4), need))
    return tb, vmem_limit


def linear_net_forward(x, weight, bias, *, row_tile=None,
                       small_batch_fallback=True):
    """y = x @ weight.T + bias, matching torch.nn.Linear(n_feature, 1).

    Args:
      x:      (B, F) float32 or bfloat16.  Feeding bf16 halves HBM traffic on
              this bandwidth-bound kernel; accumulation is always f32.
      weight: (1, F) float32 (PyTorch nn.Linear layout).
      bias:   (1,)   float32.
      row_tile: optional rows-per-tile override (multiple of 128; for tests).
      small_batch_fallback: tiny batches use a plain XLA dot (a Pallas launch
              is pure overhead there).
    Returns:
      (B, 1) float32.
    """
    B, F = x.shape
    w_row = weight.reshape(1, F).astype(jnp.float32)
    b_vec = bias.reshape(1).astype(jnp.float32)

    if small_batch_fallback and B <= 1024:
        return jnp.sum(x.astype(jnp.float32) * w_row, axis=-1,
                       keepdims=True) + b_vec

    # Narrow-feature lane packing: fold g = 128 // F rows into one 128-lane
    # group so VMEM blocks / vregs carry real data instead of lane padding.
    g = 1
    if F < 128 and 128 % F == 0 and (128 // F) <= 16 and B % (128 // F) == 0:
        g = 128 // F
    Bg, Fg = B // g, F * g
    x_in = x.reshape(Bg, Fg) if g > 1 else x            # contiguous, free reshape
    w_in = jnp.tile(w_row, (1, g)) if g > 1 else w_row  # (1, Fg)

    itemsize = jnp.dtype(x_in.dtype).itemsize
    out_row_bytes = 4 if g == 1 else 128 * 4   # (TB,) vs lane-padded (TB, g) block
    tb, vmem_limit = _choose_row_tile(Bg, Fg, itemsize, out_row_bytes,
                                      _vmem_capacity_bytes())
    if row_tile is not None:
        tb = min(int(row_tile), Bg)
    num_tiles = pl.cdiv(Bg, tb)

    if g == 1:
        out_shape = jax.ShapeDtypeStruct((Bg,), jnp.float32)
        out_specs = pl.BlockSpec((tb,), lambda i: (i,))
    else:
        out_shape = jax.ShapeDtypeStruct((Bg, g), jnp.float32)
        out_specs = pl.BlockSpec((tb, g), lambda i: (i, 0))

    in_specs = [
        pl.BlockSpec((tb, Fg), lambda i: (i, 0)),               # streamed x tiles
        pl.BlockSpec((1, Fg), lambda i: (0, 0)),                # resident weight
        pl.BlockSpec(memory_space=pltpu.MemorySpace.SMEM),      # scalar bias
    ]

    cost = pl.CostEstimate(
        flops=2 * B * F,
        transcendentals=0,
        bytes_accessed=B * F * itemsize + B * 4 + Fg * 4,
    )

    def call(dim_sems):
        return pl.pallas_call(
            _make_linear_kernel(g, F),
            out_shape=out_shape,
            grid=(num_tiles,),
            in_specs=in_specs,
            out_specs=out_specs,
            compiler_params=pltpu.CompilerParams(
                dimension_semantics=dim_sems,
                vmem_limit_bytes=vmem_limit),
            cost_estimate=cost,
        )(x_in, w_in, b_vec)

    # Shard the batch grid axis across both TensorCores on v7x; plain
    # "parallel" elsewhere (single-TC chips / unknown hardware info).
    # TODO(synk): an explicit 2-wide leading grid axis + core_map would give
    # finer per-core control on v7x if CORE_PARALLEL proves insufficient.
    if num_tiles > 1 and _num_tensorcores() > 1:
        try:
            y = call((pltpu.CORE_PARALLEL,))
        except Exception:
            y = call(("parallel",))
    else:
        y = call(("parallel",))

    # TODO(synk): for very large F, add a trailing "arbitrary" grid axis over F
    # with a (tb,) f32 accumulator scratch (and masking of the ragged F block)
    # so per-block VMEM is bounded independently of F.
    return y.reshape(B, 1)


if __name__ == "__main__":
    key = jax.random.PRNGKey(0)
    k_w, k_b, k1, k2, k3, k_w3 = jax.random.split(key, 6)

    n_feature = 32
    bound = 1.0 / (n_feature ** 0.5)
    weight = jax.random.uniform(k_w, (1, n_feature), jnp.float32,
                                minval=-bound, maxval=bound)
    bias = jax.random.uniform(k_b, (1,), jnp.float32, minval=-bound, maxval=bound)

    def reference(xv, wv, bv):
        # Elementwise multiply + f32 reduce (avoids XLA matmul default-precision
        # ambiguity in the check).
        return jnp.sum(xv.astype(jnp.float32) * wv.astype(jnp.float32),
                       axis=-1, keepdims=True) + bv

    # 1) Small shape matching the module's forward; force the Pallas path
    #    (lane-packed kernel, single tile).
    x1 = jax.random.normal(k1, (8, n_feature), jnp.float32)
    y1 = jax.block_until_ready(
        linear_net_forward(x1, weight, bias, small_batch_fallback=False))
    assert y1.shape == (8, 1)
    assert jnp.allclose(y1, reference(x1, weight, bias), atol=1e-4, rtol=1e-4)

    # 2) bf16 input (half the HBM bytes), lane-packed path, ragged batch.
    x2 = jax.random.normal(k2, (4100, n_feature), jnp.float32).astype(jnp.bfloat16)
    y2 = jax.block_until_ready(linear_net_forward(x2, weight, bias))
    assert y2.shape == (4100, 1)
    assert jnp.allclose(y2, reference(x2, weight, bias), atol=1e-4, rtol=1e-4)

    # 3) Multi-tile + ragged last block, feature count that cannot lane-pack.
    nf3 = 48
    bound3 = 1.0 / (nf3 ** 0.5)
    w3 = jax.random.uniform(k_w3, (1, nf3), jnp.float32,
                            minval=-bound3, maxval=bound3)
    x3 = jax.random.normal(k3, (20000, nf3), jnp.float32)
    y3 = jax.block_until_ready(linear_net_forward(x3, w3, bias, row_tile=4096))
    assert y3.shape == (20000, 1)
    assert jnp.allclose(y3, reference(x3, w3, bias), atol=1e-4, rtol=1e-4)

    # 4) Tiny-batch fallback path (plain XLA ops, no Pallas launch overhead).
    y4 = jax.block_until_ready(linear_net_forward(x1, weight, bias))
    assert y4.shape == (8, 1)
    assert jnp.allclose(y4, reference(x1, weight, bias), atol=1e-4, rtol=1e-4)

    print("KERNEL_OK")
</pallas_src>

<mosaic_0001>
module attributes {stable_mosaic.version = 11 : i64} {
  func.func @kernel(%arg0: i32, %arg1: memref<2x128xf32, #tpu.memory_space<vmem>>, %arg2: memref<1x128xf32, #tpu.memory_space<vmem>>, %arg3: memref<1xf32, #tpu.memory_space<smem>>, %arg4: memref<2x4xf32, #tpu.memory_space<vmem>>) attributes {dimension_semantics = [#tpu.dimension_semantics<parallel>], iteration_bounds = array<i64: 1>, scalar_prefetch = 0 : i64, scratch_operands = 0 : i64, tpu.core_type = #tpu.core_type<tc>, window_params = [{transform_indices = @transform_0, window_bounds = array<i64: 2, 128>}, {pipeline_mode = #tpu.pipeline_mode<synchronous>, transform_indices = @transform_1, window_bounds = array<i64: 1, 128>}, {transform_indices = @transform_2, window_bounds = array<i64: 1>}, {transform_indices = @transform_3, window_bounds = array<i64: 2, 4>}]} {
    %c0 = arith.constant 0 : index
    %c0_0 = arith.constant 0 : index
    %0 = vector.load %arg1[%c0, %c0_0] : memref<2x128xf32, #tpu.memory_space<vmem>>, vector<2x128xf32>
    %c0_1 = arith.constant 0 : index
    %c0_2 = arith.constant 0 : index
    %1 = vector.load %arg2[%c0_1, %c0_2] : memref<1x128xf32, #tpu.memory_space<vmem>>, vector<1x128xf32>
    %2 = vector.broadcast %1 : vector<1x128xf32> to vector<2x128xf32>
    %3 = arith.mulf %0, %2 : vector<2x128xf32>
    %c0_3 = arith.constant 0 : index
    %4 = memref.load %arg3[%c0_3] : memref<1xf32, #tpu.memory_space<smem>>
    %5 = tpu.iota {dimensions = array<i32: 1>} : vector<2x128xi32>
    %c0_i32 = arith.constant 0 : i32
    %6 = vector.broadcast %c0_i32 : i32 to vector<2x128xi32>
    %7 = arith.cmpi sge, %5, %6 : vector<2x128xi32>
    %c32_i32 = arith.constant 32 : i32
    %8 = vector.broadcast %c32_i32 : i32 to vector<2x128xi32>
    %9 = arith.cmpi slt, %5, %8 : vector<2x128xi32>
    %10 = arith.andi %7, %9 : vector<2x128xi1>
    %cst = arith.constant 0.000000e+00 : f32
    %11 = vector.broadcast %cst : f32 to vector<2x128xf32>
    %12 = arith.select %10, %3, %11 : vector<2x128xi1>, vector<2x128xf32>
    %cst_4 = arith.constant dense<0.000000e+00> : vector<2xf32>
    %13 = vector.multi_reduction <add>, %12, %cst_4 [1] : vector<2x128xf32> to vector<2xf32>
    %14 = vector.shape_cast %13 : vector<2xf32> to vector<2x1xf32>
    %15 = vector.broadcast %4 : f32 to vector<2x1xf32>
    %16 = arith.addf %14, %15 : vector<2x1xf32>
    %c32_i32_5 = arith.constant 32 : i32
    %17 = vector.broadcast %c32_i32_5 : i32 to vector<2x128xi32>
    %18 = arith.cmpi sge, %5, %17 : vector<2x128xi32>
    %c64_i32 = arith.constant 64 : i32
    %19 = vector.broadcast %c64_i32 : i32 to vector<2x128xi32>
    %20 = arith.cmpi slt, %5, %19 : vector<2x128xi32>
    %21 = arith.andi %18, %20 : vector<2x128xi1>
    %cst_6 = arith.constant 0.000000e+00 : f32
    %22 = vector.broadcast %cst_6 : f32 to vector<2x128xf32>
    %23 = arith.select %21, %3, %22 : vector<2x128xi1>, vector<2x128xf32>
    %cst_7 = arith.constant dense<0.000000e+00> : vector<2xf32>
    %24 = vector.multi_reduction <add>, %23, %cst_7 [1] : vector<2x128xf32> to vector<2xf32>
    %25 = vector.shape_cast %24 : vector<2xf32> to vector<2x1xf32>
    %26 = vector.broadcast %4 : f32 to vector<2x1xf32>
    %27 = arith.addf %25, %26 : vector<2x1xf32>
    %c64_i32_8 = arith.constant 64 : i32
    %28 = vector.broadcast %c64_i32_8 : i32 to vector<2x128xi32>
    %29 = arith.cmpi sge, %5, %28 : vector<2x128xi32>
    %c96_i32 = arith.constant 96 : i32
    %30 = vector.broadcast %c96_i32 : i32 to vector<2x128xi32>
    %31 = arith.cmpi slt, %5, %30 : vector<2x128xi32>
    %32 = arith.andi %29, %31 : vector<2x128xi1>
    %cst_9 = arith.constant 0.000000e+00 : f32
    %33 = vector.broadcast %cst_9 : f32 to vector<2x128xf32>
    %34 = arith.select %32, %3, %33 : vector<2x128xi1>, vector<2x128xf32>
    %cst_10 = arith.constant dense<0.000000e+00> : vector<2xf32>
    %35 = vector.multi_reduction <add>, %34, %cst_10 [1] : vector<2x128xf32> to vector<2xf32>
    %36 = vector.shape_cast %35 : vector<2xf32> to vector<2x1xf32>
    %37 = vector.broadcast %4 : f32 to vector<2x1xf32>
    %38 = arith.addf %36, %37 : vector<2x1xf32>
    %c96_i32_11 = arith.constant 96 : i32
    %39 = vector.broadcast %c96_i32_11 : i32 to vector<2x128xi32>
    %40 = arith.cmpi sge, %5, %39 : vector<2x128xi32>
    %c128_i32 = arith.constant 128 : i32
    %41 = vector.broadcast %c128_i32 : i32 to vector<2x128xi32>
    %42 = arith.cmpi slt, %5, %41 : vector<2x128xi32>
    %43 = arith.andi %40, %42 : vector<2x128xi1>
    %cst_12 = arith.constant 0.000000e+00 : f32
    %44 = vector.broadcast %cst_12 : f32 to vector<2x128xf32>
    %45 = arith.select %43, %3, %44 : vector<2x128xi1>, vector<2x128xf32>
    %cst_13 = arith.constant dense<0.000000e+00> : vector<2xf32>
    %46 = vector.multi_reduction <add>, %45, %cst_13 [1] : vector<2x128xf32> to vector<2xf32>
    %47 = vector.shape_cast %46 : vector<2xf32> to vector<2x1xf32>
    %48 = vector.broadcast %4 : f32 to vector<2x1xf32>
    %49 = arith.addf %47, %48 : vector<2x1xf32>
    %50 = tpu.concatenate %16, %27, %38, %49 in 1 : vector<2x1xf32>, vector<2x1xf32>, vector<2x1xf32>, vector<2x1xf32> -> vector<2x4xf32>
    %c0_14 = arith.constant 0 : index
    %c0_15 = arith.constant 0 : index
    %51 = vector.load %arg4[%c0_14, %c0_15] : memref<2x4xf32, #tpu.memory_space<vmem>>, vector<2x4xf32>
    tpu.vector_store %arg4[%c0_14, %c0_15], %50 {strides = array<i32>} : memref<2x4xf32, #tpu.memory_space<vmem>>, vector<2x4xf32>,
    return
  }
  func.func @transform_0(%arg0: i32) -> (i32, i32) {
    %c0_i32 = arith.constant 0 : i32
    %c0_i32_0 = arith.constant 0 : i32
    return %arg0, %c0_i32 : i32, i32
  }
  func.func @transform_1(%arg0: i32) -> (i32, i32) {
    %c0_i32 = arith.constant 0 : i32
    %c0_i32_0 = arith.constant 0 : i32
    %c0_i32_1 = arith.constant 0 : i32
    return %c0_i32, %c0_i32_0 : i32, i32
  }
  func.func @transform_2(%arg0: i32) -> i32 {
    %c0_i32 = arith.constant 0 : i32
    %c0_i32_0 = arith.constant 0 : i32
    return %c0_i32 : i32
  }
  func.func @transform_3(%arg0: i32) -> (i32, i32) {
    %c0_i32 = arith.constant 0 : i32
    %c0_i32_0 = arith.constant 0 : i32
    return %arg0, %c0_i32 : i32, i32
  }
}

</mosaic_0001>

<llo_original>
// kernel: tpu_custom_call.1
$region0: #{tpu_custom_call.1}
  #allocation0 [shape = 'u32[]', space=smem, size = 0x4, offset = 0x4, fixed_abs, tag = 'smem constant byte address 0x4 - core index']
  #allocation1 [shape = 'u32[144,128]{1,0:T(1,128)}', space=vmem, size = 0x12000, scoped, tag = 'internal scratch']
  #allocation2 [shape = 'f32[1]{0:T(128)S(6)}', space=smem, size = 0x200, scoped, tag = 'scoped memory for tpu_custom_call.1']
  %s0 = inlined_call_operand.vmem [shape: f32[2,128], index: 0, kind: input, shape index: {}]
  %s1 = inlined_call_operand.vmem [shape: f32[1,128], index: 1, kind: input, shape index: {}]
  %s2 = inlined_call_operand.<no memory space> [shape: f32[1], index: 2, kind: input, shape index: {}]
  %s3 = inlined_call_operand.hbm [shape: f32[2,4], index: 3, kind: output, shape index: {}]
  %s4 = sld [smem:[#allocation0]]
  $region22: #{tpu_custom_call.1} parent=0
    _
  %s6 = ssub.s32 1, %s4
  %s7 = scalar_select 0, %s6, %s4
  %8 = sst [smem:[#allocation2]] %s2
  $region1: #{tpu_custom_call.1} parent=0
    #allocation3 [shape = 'u8[1024]{0}', space=vmem, size = 0x400, scoped, tag = 'output window, operand 0, single buffered']
    #allocation4 [shape = 's32[1]{0}', space=sflag, size = 0x4, scoped, tag = 'scoped memory for tpu_custom_call.1']
    %9 = vsyncpa [#allocation4], 0
    // Predicated region
    $region2: #{tpu_custom_call.1} parent=1 // pred_check
      _
    $region3: #{tpu_custom_call.1} parent=1 // pred_check_branch
      %11 = sbr.rel (0) target = $region5
    $region4: #{tpu_custom_call.1} parent=1 // pred_region
      _
    $region5: #{tpu_custom_call.1} parent=1 // pred_fallthru
      _
    // Predicated region
    $region6: #{tpu_custom_call.1} parent=1 // pred_check
      _
    $region7: #{tpu_custom_call.1} parent=1 // pred_check_branch
      %13 = sbr.rel (0) target = $region9
    $region8: #{tpu_custom_call.1} parent=1 // pred_region
      _
    $region9: #{tpu_custom_call.1} parent=1 // pred_fallthru
      _
    // Predicated region
    $region10: #{tpu_custom_call.1} parent=1 // pred_check
      _
    $region11: #{tpu_custom_call.1} parent=1 // pred_check_branch
      %15 = sbr.rel (0) target = $region13
    $region12: #{tpu_custom_call.1} parent=1 // pred_region
      _
    $region13: #{tpu_custom_call.1} parent=1 // pred_fallthru
      _
    %v16 = vld [vmem:[%s0] sm:$0x3]
    %v17 = vld [vmem:[%s1] sm:$0x1]
    %v19 = vlaneseq
    %v20 = vshrl.u32 %v19, 7
    %v21 = vsub.s32 0, %v20
    %v22 = vrot.slane %v17, %v21
    %v24 = vmul.f32 %v16, %v22
    %s25 = sld [smem:[#allocation2]]
    %v26 = vlaneseq
    %v27 = vand.u32 %v26, 127
    %vm28 = vcmp.ge.s32.totalorder %v27, 0
    %vm29 = vcmp.lt.s32.totalorder %v27, 32
    %vm30 = vmand %vm28, %vm29
    %v31 = vsel %vm30, %v24, 0.0
    %vm32 = vcmask 1041408
    %v33 = vsel %vm32, %v31, 0.0
    %34 = vadd.xlane.f32.xlu0 %v33
    %v35 = vpop.xlane.xlu0 %34
    %v36 = vstv %s25
    %v37 = vadd.f32 %v35, %v36
    %vm38 = vcmp.ge.s32.totalorder %v27, 32
    %vm39 = vcmp.lt.s32.totalorder %v27, 64
    %vm40 = vmand %vm38, %vm39
    %v41 = vsel %vm40, %v24, 0.0
    %v42 = vsel %vm32, %v41, 0.0
    %43 = vadd.xlane.f32.xlu0 %v42
    %v44 = vpop.xlane.xlu0 %43
    %v45 = vadd.f32 %v44, %v36
    %vm46 = vcmp.ge.s32.totalorder %v27, 64
    %vm47 = vcmp.lt.s32.totalorder %v27, 96
    %vm48 = vmand %vm46, %vm47
    %v49 = vsel %vm48, %v24, 0.0
    %v50 = vsel %vm32, %v49, 0.0
    %51 = vadd.xlane.f32.xlu0 %v50
    %v52 = vpop.xlane.xlu0 %51
    %v53 = vadd.f32 %v52, %v36
    %vm54 = vcmp.ge.s32.totalorder %v27, 96
    %vm55 = vcmp.lt.s32.totalorder %v27, 128
    %vm56 = vmand %vm54, %vm55
    %v57 = vsel %vm56, %v24, 0.0
    %v58 = vsel %vm32, %v57, 0.0
    %59 = vadd.xlane.f32.xlu0 %v58
    %v60 = vpop.xlane.xlu0 %59
    %v61 = vadd.f32 %v60, %v36
    %vm62 = vcmask 7168
    %v63 = vsel %vm62, %v37, %v45
    %vm64 = vcmask 15360
    %v65 = vsel %vm64, %v63, %v53
    %vm66 = vcmask 23552
    %v67 = vsel %vm66, %v65, %v61
    %vm68 = vcmask 25600
    %69 = vst.msk [vmem:[#allocation3] sm:$0x3] %vm68, %v67
    // Predicated region
    $region14: #{tpu_custom_call.1} parent=1 // pred_check
      _
    $region15: #{tpu_custom_call.1} parent=1 // pred_check_branch
      %71 = sbr.rel (0) target = $region17
    $region16: #{tpu_custom_call.1} parent=1 // pred_region
      %s73 = ssub.s32 32, 32
      %74 = vsyncadd [#allocation4], %s73
      %s76 = sshll.u32 [#allocation3], 4
      %s77 = int_to_ptr.vmem [resolvable:$true] %s76
      %79 = dma.vmem_to_hbm [thread:$0]  %s77, 32, %s3, [#allocation4]
    $region17: #{tpu_custom_call.1} parent=1 // pred_fallthru
      _
    // Predicated region
    $region18: #{tpu_custom_call.1} parent=1 // pred_check
      _
    $region19: #{tpu_custom_call.1} parent=1 // pred_check_branch
      %81 = sbr.rel (0) target = $region21
    $region20: #{tpu_custom_call.1} parent=1 // pred_region
      %82 = dma.done [#allocation4], 32
    $region21: #{tpu_custom_call.1} parent=1 // pred_fallthru
      _
    %83 = vsyncpa [#allocation4], 1

</llo_original>
